<compile_context>
chip_gen: v7x
topology: tpu7x:2x2x1
jax: 0.10.0
libtpu: 0.0.40
codegen_flags: <defaults>
</compile_context>

<pallas_src>
import functools
import math

import jax
import jax.numpy as jnp
from jax import lax
from jax.experimental import pallas as pl
from jax.experimental.pallas import tpu as pltpu

_MASK_VALUE = -1e30          # finite "-inf": exp underflows to 0, avoids NaN in online softmax
_VMEM_LIMIT = 32 * 1024 * 1024


# ---------------------------------------------------------------------------
# Pallas tiled matmul (projections)
# ---------------------------------------------------------------------------
def _matmul_kernel(a_ref, b_ref, o_ref, acc_ref):
    @pl.when(pl.program_id(2) == 0)
    def _():
        acc_ref[...] = jnp.zeros_like(acc_ref)

    acc_ref[...] += jnp.dot(a_ref[...], b_ref[...],
                            preferred_element_type=jnp.float32)

    # Only cast + store the output tile once, on the final reduction step.
    @pl.when(pl.program_id(2) == pl.num_programs(2) - 1)
    def _():
        o_ref[...] = acc_ref[...].astype(o_ref.dtype)


def pallas_matmul(a, b, *, out_dtype=None, tm=256, tn=256, tk=512):
    """a @ b with f32 accumulation on the MXU.  a: (M, K), b: (K, N)."""
    M, K = a.shape
    K2, N = b.shape
    assert K == K2, (a.shape, b.shape)
    tm, tn, tk = min(tm, M), min(tn, N), min(tk, K)
    assert M % tm == 0 and N % tn == 0 and K % tk == 0, (M, N, K, tm, tn, tk)
    out_dtype = a.dtype if out_dtype is None else out_dtype
    grid = (M // tm, N // tn, K // tk)
    return pl.pallas_call(
        _matmul_kernel,
        out_shape=jax.ShapeDtypeStruct((M, N), out_dtype),
        grid_spec=pltpu.PrefetchScalarGridSpec(
            num_scalar_prefetch=0,
            grid=grid,
            in_specs=[
                pl.BlockSpec((tm, tk), lambda i, j, k: (i, k)),
                pl.BlockSpec((tk, tn), lambda i, j, k: (k, j)),
            ],
            out_specs=pl.BlockSpec((tm, tn), lambda i, j, k: (i, j)),
            scratch_shapes=[pltpu.VMEM((tm, tn), jnp.float32)],
        ),
        compiler_params=pltpu.CompilerParams(
            dimension_semantics=("parallel", "parallel", "arbitrary"),
            vmem_limit_bytes=_VMEM_LIMIT,
        ),
    )(a, b)


# ---------------------------------------------------------------------------
# Fused flash-attention kernel (online softmax), head selected via index_map
# ---------------------------------------------------------------------------
def _flash_kernel(*refs, has_mask):
    if has_mask:
        q_ref, k_ref, v_ref, mask_ref, o_ref, m_sc, l_sc, acc_sc = refs
    else:
        q_ref, k_ref, v_ref, o_ref, m_sc, l_sc, acc_sc = refs
        mask_ref = None

    kv_idx = pl.program_id(3)

    @pl.when(kv_idx == 0)
    def _():
        m_sc[...] = jnp.full_like(m_sc, -jnp.inf)
        l_sc[...] = jnp.zeros_like(l_sc)
        acc_sc[...] = jnp.zeros_like(acc_sc)

    q = q_ref[0]                       # (block_q, d_k), compute dtype (bf16 or f32)
    k = k_ref[0]                       # (block_kv, d_k)
    v = v_ref[0]                       # (block_kv, d_k)

    # QK^T without materializing a K transpose: contract the last dim of both operands.
    # Softmax scale is already folded into W_q, so no extra multiply here.
    s = lax.dot_general(q, k, (((1,), (1,)), ((), ())),
                        preferred_element_type=jnp.float32)

    if has_mask:
        s = jnp.where(mask_ref[0, 0] == 0, _MASK_VALUE, s)   # reference: masked_fill(mask==0, -inf)

    m_prev = m_sc[...]
    m_new = jnp.maximum(m_prev, s.max(axis=-1, keepdims=True))
    alpha = jnp.exp(m_prev - m_new)
    p = jnp.exp(s - m_new)                                    # f32 softmax math (v5e-safe)
    l_sc[...] = alpha * l_sc[...] + p.sum(axis=-1, keepdims=True)
    acc_sc[...] = alpha * acc_sc[...] + jnp.dot(
        p.astype(v.dtype), v, preferred_element_type=jnp.float32)
    m_sc[...] = m_new

    @pl.when(kv_idx == pl.num_programs(3) - 1)
    def _():
        inv_l = pl.reciprocal(l_sc[...], approx=False)        # exact; once per q tile, negligible
        o_ref[0] = (acc_sc[...] * inv_l).astype(o_ref.dtype)


def flash_attention(q, k, v, mask, *, num_heads, d_k,
                    q_head_offset=0, k_head_offset=0, v_head_offset=0,
                    block_q=256, block_kv=512):
    """q/k/v: (B, S, n_cols) activations where head h occupies column block
    (offset + h) * d_k.  mask: None or (B, 1|H, Sq, Sk) int8 (0 == masked out).
    Returns (B, Sq, H*d_k)."""
    B, Sq, _ = q.shape
    Sk = k.shape[1]
    assert d_k % 128 == 0, "head dim must be lane-dense (multiple of 128)"
    block_q = min(block_q, Sq)
    block_kv = min(block_kv, Sk)
    assert Sq % block_q == 0 and Sk % block_kv == 0, (Sq, Sk, block_q, block_kv)

    qo, ko, vo = q_head_offset, k_head_offset, v_head_offset
    in_specs = [
        pl.BlockSpec((1, block_q, d_k), lambda b, h, i, j: (b, i, qo + h)),
        pl.BlockSpec((1, block_kv, d_k), lambda b, h, i, j: (b, j, ko + h)),
        pl.BlockSpec((1, block_kv, d_k), lambda b, h, i, j: (b, j, vo + h)),
    ]
    args = [q, k, v]
    has_mask = mask is not None
    if has_mask:
        assert mask.shape[0] == B and mask.shape[2] == Sq and mask.shape[3] == Sk
        if mask.shape[1] == 1:                                # broadcast over heads
            mask_map = lambda b, h, i, j: (b, 0, i, j)
        else:
            assert mask.shape[1] == num_heads
            mask_map = lambda b, h, i, j: (b, h, i, j)
        in_specs.append(pl.BlockSpec((1, 1, block_q, block_kv), mask_map))
        args.append(mask)

    grid = (B, num_heads, Sq // block_q, Sk // block_kv)
    kernel = functools.partial(_flash_kernel, has_mask=has_mask)
    return pl.pallas_call(
        kernel,
        out_shape=jax.ShapeDtypeStruct((B, Sq, num_heads * d_k), q.dtype),
        grid_spec=pltpu.PrefetchScalarGridSpec(
            num_scalar_prefetch=0,
            grid=grid,
            in_specs=in_specs,
            out_specs=pl.BlockSpec((1, block_q, d_k), lambda b, h, i, j: (b, i, h)),
            scratch_shapes=[
                pltpu.VMEM((block_q, 1), jnp.float32),    # running max m
                pltpu.VMEM((block_q, 1), jnp.float32),    # running denom l
                pltpu.VMEM((block_q, d_k), jnp.float32),  # output accumulator
            ],
        ),
        compiler_params=pltpu.CompilerParams(
            dimension_semantics=("parallel", "parallel", "parallel", "arbitrary"),
            vmem_limit_bytes=_VMEM_LIMIT,
        ),
    )(*args)


# ---------------------------------------------------------------------------
# Rotary embedding (matches the reference RotaryEmbedding exactly)
# ---------------------------------------------------------------------------
def _build_rope_cache(dim, max_seq_len, base=10000.0):
    inv_freq = 1.0 / (base ** (jnp.arange(0, dim, 2, dtype=jnp.float32) / dim))
    t = jnp.arange(max_seq_len, dtype=jnp.float32)
    freqs = jnp.einsum("i,j->ij", t, inv_freq)
    emb = jnp.concatenate([freqs, freqs], axis=-1)
    return jnp.cos(emb), jnp.sin(emb)


def _rotate_half(x):
    x1 = x[..., ::2]
    x2 = x[..., 1::2]
    return jnp.concatenate([-x2, x1], axis=-1)


# ---------------------------------------------------------------------------
# MultiHeadAttention module (forward semantics of the PyTorch reference)
# ---------------------------------------------------------------------------
class MultiHeadAttention:
    def __init__(self, d_model, h, dropout, use_rope=False, max_seq_len=0, *,
                 key, param_dtype=jnp.float32, compute_dtype=jnp.bfloat16):
        assert d_model % h == 0, "d_model is not divisible by head"
        self.d_model = d_model
        self.h = h
        self.d_k = d_model // h
        self.param_dtype = param_dtype
        self.compute_dtype = compute_dtype
        # TODO(synk): training-mode dropout on attention probs is not implemented
        # (inference path: dropout is identity, matching the reference with training=False).
        self.dropout_p = dropout

        kq, kk, kv, ko = jax.random.split(key, 4)
        bound = 1.0 / math.sqrt(d_model)   # nn.Linear(bias=False) kaiming-uniform bound
        init = lambda k: jax.random.uniform(k, (d_model, d_model), param_dtype,
                                            minval=-bound, maxval=bound)
        self.w_q, self.w_k, self.w_v, self.w_o = init(kq), init(kk), init(kv), init(ko)

        # ---- precomputed kernel operands: built once, not per forward call ----
        scale = 1.0 / math.sqrt(self.d_k)
        wq_t = self.w_q.T * scale                       # fold softmax scale into W_q
        self._w_qkv_t = jnp.concatenate([wq_t, self.w_k.T, self.w_v.T],
                                        axis=1).astype(compute_dtype)
        self._w_q_t = wq_t.astype(compute_dtype)
        self._w_k_t = self.w_k.T.astype(compute_dtype)
        self._w_v_t = self.w_v.T.astype(compute_dtype)
        self._w_o_t = self.w_o.T.astype(compute_dtype)

        self.use_rope = use_rope
        if use_rope:
            if max_seq_len <= 0:
                raise ValueError("max_seq_len must be positive when use_rope is True")
            cos, sin = _build_rope_cache(self.d_k, max_seq_len)
            self.cos_cached, self.sin_cached = cos, sin
            ones, zeros = jnp.ones_like(cos), jnp.zeros_like(cos)
            # 3-slot (q, k, v) cos/sin so RoPE applies to the fused QKV activation in one
            # elementwise pass; the v slot (cos=1, sin=0) is an identity.
            self._cos3 = jnp.stack([cos, cos, ones], axis=1)    # (max_seq, 3, d_k)
            self._sin3 = jnp.stack([sin, sin, zeros], axis=1)   # (max_seq, 3, d_k)
        else:
            self.cos_cached = self.sin_cached = None

    # RoPE on the fused (B, S, 3*H*d_k) activation — no transposes, no column slicing.
    def _rope_fused_qkv(self, qkv, B, S):
        x = qkv.reshape(B, S, 3, self.h, self.d_k).astype(jnp.float32)
        cos = self._cos3[:S][None, :, :, None, :]
        sin = self._sin3[:S][None, :, :, None, :]
        y = x * cos + _rotate_half(x) * sin
        return y.reshape(B, S, 3 * self.d_model).astype(qkv.dtype)

    # RoPE on a (B, S, H*d_k) activation (cross-attention path).
    def _rope_flat(self, act, B, S):
        x = act.reshape(B, S, self.h, self.d_k).astype(jnp.float32)
        cos = self.cos_cached[:S][None, :, None, :]
        sin = self.sin_cached[:S][None, :, None, :]
        y = x * cos + _rotate_half(x) * sin
        return y.reshape(B, S, self.d_model).astype(act.dtype)

    def __call__(self, q_in, k_in, v_in, mask, return_attention_scores=False):
        B, Sq, _ = q_in.shape
        Sk = k_in.shape[1]
        cd = self.compute_dtype
        H, d_k, d_model = self.h, self.d_k, self.d_model

        if q_in is k_in and k_in is v_in:
            # Self-attention: single fused QKV matmul; activations stay (B, S, 3*d_model).
            qkv = pallas_matmul(q_in.reshape(B * Sq, d_model).astype(cd), self._w_qkv_t)
            qkv = qkv.reshape(B, Sq, 3 * d_model)
            if self.use_rope:
                qkv = self._rope_fused_qkv(qkv, B, Sq)
            q_act = k_act = v_act = qkv
            q_off, k_off, v_off = 0, H, 2 * H
        else:
            q_act = pallas_matmul(q_in.reshape(B * Sq, d_model).astype(cd),
                                  self._w_q_t).reshape(B, Sq, d_model)
            k_act = pallas_matmul(k_in.reshape(B * Sk, d_model).astype(cd),
                                  self._w_k_t).reshape(B, Sk, d_model)
            v_act = pallas_matmul(v_in.reshape(B * Sk, d_model).astype(cd),
                                  self._w_v_t).reshape(B, Sk, d_model)
            if self.use_rope:
                q_act = self._rope_flat(q_act, B, Sq)
                k_act = self._rope_flat(k_act, B, Sk)
            q_off = k_off = v_off = 0

        if mask is not None:
            if mask.ndim == 3:
                mask = mask[:, None]
            mask = (mask != 0).astype(jnp.int8)     # 4x smaller per-step DMA than f32

        x = flash_attention(q_act, k_act, v_act, mask, num_heads=H, d_k=d_k,
                            q_head_offset=q_off, k_head_offset=k_off,
                            v_head_offset=v_off)

        # Output already in (B, Sq, H*d_k) layout — reshape is free, no transpose.
        x = pallas_matmul(x.reshape(B * Sq, d_model), self._w_o_t,
                          out_dtype=self.param_dtype)
        x = x.reshape(B, Sq, d_model)

        if return_attention_scores:
            # Flash path of the reference never materializes the score matrix -> None.
            return x, None
        return x


# ---------------------------------------------------------------------------
# Pure-JAX reference for correctness checking
# ---------------------------------------------------------------------------
def _mha_reference(mha, q_in, k_in, v_in, mask):
    with jax.default_matmul_precision("highest"):
        B, Sq, d = q_in.shape
        Sk = k_in.shape[1]

        def split(x, S):
            return jnp.transpose(x.reshape(B, S, mha.h, mha.d_k), (0, 2, 1, 3))

        q = split(q_in @ mha.w_q.T, Sq)
        k = split(k_in @ mha.w_k.T, Sk)
        v = split(v_in @ mha.w_v.T, Sk)
        if mha.use_rope:
            cos_q = mha.cos_cached[:Sq][None, None]
            sin_q = mha.sin_cached[:Sq][None, None]
            cos_k = mha.cos_cached[:Sk][None, None]
            sin_k = mha.sin_cached[:Sk][None, None]
            q = q * cos_q + _rotate_half(q) * sin_q
            k = k * cos_k + _rotate_half(k) * sin_k
        scores = jnp.einsum("bhqd,bhkd->bhqk", q, k) / math.sqrt(mha.d_k)
        if mask is not None:
            m4 = mask if mask.ndim == 4 else mask[:, None]
            scores = jnp.where(m4 == 0, -jnp.inf, scores)
        attn = jax.nn.softmax(scores, axis=-1)
        x = jnp.einsum("bhqk,bhkd->bhqd", attn, v)
        x = jnp.transpose(x, (0, 2, 1, 3)).reshape(B, Sq, d)
        return x @ mha.w_o.T


if __name__ == "__main__":
    # Lane-dense small shapes: d_k = 128, score tiles 128x128.
    batch, seq, d_model, heads = 2, 128, 256, 2
    root = jax.random.PRNGKey(0)
    k_param, k_x, k_y = jax.random.split(root, 3)

    x = jax.random.normal(k_x, (batch, seq, d_model), jnp.float32)
    y = jax.random.normal(k_y, (batch, seq, d_model), jnp.float32)
    causal = jnp.tril(jnp.ones((seq, seq), jnp.float32))[None, None]
    causal = jnp.broadcast_to(causal, (batch, 1, seq, seq))

    # 1) f32 compute path: tight parity vs pure-JAX reference
    mha32 = MultiHeadAttention(d_model, heads, dropout=0.1, key=k_param,
                               compute_dtype=jnp.float32)
    out32 = jax.block_until_ready(mha32(x, x, x, causal))
    ref32 = _mha_reference(mha32, x, x, x, causal)
    assert out32.shape == (batch, seq, d_model)
    assert jnp.allclose(out32, ref32, atol=5e-3, rtol=5e-3), (
        "f32 max abs err", float(jnp.max(jnp.abs(out32 - ref32))))

    # 2) bf16 compute path (default): looser tolerance vs f32 reference
    mha16 = MultiHeadAttention(d_model, heads, dropout=0.1, key=k_param)
    out16 = jax.block_until_ready(mha16(x, x, x, causal))
    ref16 = _mha_reference(mha16, x, x, x, causal)
    assert jnp.allclose(out16, ref16, atol=5e-2, rtol=5e-2), (
        "bf16 max abs err", float(jnp.max(jnp.abs(out16 - ref16))))

    # 3) return_attention_scores: flash path -> scores is None, output unchanged
    out16b, scores = mha16(x, x, x, causal, return_attention_scores=True)
    jax.block_until_ready(out16b)
    assert scores is None
    assert jnp.allclose(out16b, out16)

    # 4) mask=None path (dedicated no-mask kernel variant, no dummy mask DMA)
    out_nm = jax.block_until_ready(mha32(x, x, x, None))
    ref_nm = _mha_reference(mha32, x, x, x, None)
    assert jnp.allclose(out_nm, ref_nm, atol=5e-3, rtol=5e-3), (
        "no-mask max abs err", float(jnp.max(jnp.abs(out_nm - ref_nm))))

    # 5) use_rope=True path (fused QKV + single-pass rotary on q/k slots)
    mha_rope = MultiHeadAttention(d_model, heads, dropout=0.0, use_rope=True,
                                  max_seq_len=seq, key=k_param,
                                  compute_dtype=jnp.float32)
    out_r = jax.block_until_ready(mha_rope(x, x, x, causal))
    ref_r = _mha_reference(mha_rope, x, x, x, causal)
    assert jnp.allclose(out_r, ref_r, atol=5e-3, rtol=5e-3), (
        "rope max abs err", float(jnp.max(jnp.abs(out_r - ref_r))))

    # 6) cross-attention (separate projection path)
    out_x = jax.block_until_ready(mha32(x, y, y, None))
    ref_x = _mha_reference(mha32, x, y, y, None)
    assert jnp.allclose(out_x, ref_x, atol=5e-3, rtol=5e-3), (
        "cross-attn max abs err", float(jnp.max(jnp.abs(out_x - ref_x))))

    print("KERNEL_OK")
</pallas_src>

<mosaic_0001>
module attributes {stable_mosaic.version = 11 : i64} {
  func.func @_matmul_kernel(%arg0: i32, %arg1: i32, %arg2: i32, %arg3: memref<256x256xf32, #tpu.memory_space<vmem>>, %arg4: memref<256x256xf32, #tpu.memory_space<vmem>>, %arg5: memref<256x256xf32, #tpu.memory_space<vmem>>, %arg6: memref<256x256xf32, #tpu.memory_space<vmem>>) attributes {dimension_semantics = [#tpu.dimension_semantics<parallel>, #tpu.dimension_semantics<parallel>, #tpu.dimension_semantics<arbitrary>], iteration_bounds = array<i64: 1, 3, 1>, scalar_prefetch = 0 : i64, scratch_operands = 1 : i64, tpu.core_type = #tpu.core_type<tc>, window_params = [{transform_indices = @transform_0, window_bounds = array<i64: 256, 256>}, {transform_indices = @transform_1, window_bounds = array<i64: 256, 256>}, {transform_indices = @transform_2, window_bounds = array<i64: 256, 256>}]} {
    %c0_i32 = arith.constant 0 : i32
    %0 = arith.cmpi eq, %arg2, %c0_i32 : i32
    %1 = arith.extui %0 : i1 to i32
    %c0_i32_0 = arith.constant 0 : i32
    %2 = arith.cmpi ne, %1, %c0_i32_0 : i32
    scf.if %2 {
      %cst_10 = arith.constant 0.000000e+00 : f32
      %12 = vector.broadcast %cst_10 : f32 to vector<256x256xf32>
      %c0_11 = arith.constant 0 : index
      %c0_12 = arith.constant 0 : index
      %13 = vector.load %arg6[%c0_11, %c0_12] : memref<256x256xf32, #tpu.memory_space<vmem>>, vector<256x256xf32>
      tpu.vector_store %arg6[%c0_11, %c0_12], %12 {strides = array<i32>} : memref<256x256xf32, #tpu.memory_space<vmem>>, vector<256x256xf32>,
    } else {
    }
    %c0 = arith.constant 0 : index
    %c0_1 = arith.constant 0 : index
    %3 = vector.load %arg6[%c0, %c0_1] : memref<256x256xf32, #tpu.memory_space<vmem>>, vector<256x256xf32>
    %c0_2 = arith.constant 0 : index
    %c0_3 = arith.constant 0 : index
    %4 = vector.load %arg3[%c0_2, %c0_3] : memref<256x256xf32, #tpu.memory_space<vmem>>, vector<256x256xf32>
    %c0_4 = arith.constant 0 : index
    %c0_5 = arith.constant 0 : index
    %5 = vector.load %arg4[%c0_4, %c0_5] : memref<256x256xf32, #tpu.memory_space<vmem>>, vector<256x256xf32>
    %cst = arith.constant dense<0.000000e+00> : vector<256x256xf32>
    %6 = tpu.matmul %4, %5, %cst {dimension_numbers = #tpu.dot_dimension_numbers<[1], [0], [0], [1], [0, 0, 1, 1], [], []>} : vector<256x256xf32>, vector<256x256xf32>, vector<256x256xf32> -> vector<256x256xf32>
    %7 = arith.addf %3, %6 : vector<256x256xf32>
    %c0_6 = arith.constant 0 : index
    %c0_7 = arith.constant 0 : index
    %8 = vector.load %arg6[%c0_6, %c0_7] : memref<256x256xf32, #tpu.memory_space<vmem>>, vector<256x256xf32>
    tpu.vector_store %arg6[%c0_6, %c0_7], %7 {strides = array<i32>} : memref<256x256xf32, #tpu.memory_space<vmem>>, vector<256x256xf32>,
    %c0_i32_8 = arith.constant 0 : i32
    %9 = arith.cmpi eq, %arg2, %c0_i32_8 : i32
    %10 = arith.extui %9 : i1 to i32
    %c0_i32_9 = arith.constant 0 : i32
    %11 = arith.cmpi ne, %10, %c0_i32_9 : i32
    scf.if %11 {
      %c0_10 = arith.constant 0 : index
      %c0_11 = arith.constant 0 : index
      %12 = vector.load %arg6[%c0_10, %c0_11] : memref<256x256xf32, #tpu.memory_space<vmem>>, vector<256x256xf32>
      %c0_12 = arith.constant 0 : index
      %c0_13 = arith.constant 0 : index
      %13 = vector.load %arg5[%c0_12, %c0_13] : memref<256x256xf32, #tpu.memory_space<vmem>>, vector<256x256xf32>
      tpu.vector_store %arg5[%c0_12, %c0_13], %12 {strides = array<i32>} : memref<256x256xf32, #tpu.memory_space<vmem>>, vector<256x256xf32>,
    } else {
    }
    return
  }
  func.func @transform_0(%arg0: i32, %arg1: i32, %arg2: i32) -> (i32, i32) {
    %c0_i32 = arith.constant 0 : i32
    return %arg0, %arg2 : i32, i32
  }
  func.func @transform_1(%arg0: i32, %arg1: i32, %arg2: i32) -> (i32, i32) {
    %c0_i32 = arith.constant 0 : i32
    return %arg2, %arg1 : i32, i32
  }
  func.func @transform_2(%arg0: i32, %arg1: i32, %arg2: i32) -> (i32, i32) {
    %c0_i32 = arith.constant 0 : i32
    return %arg0, %arg1 : i32, i32
  }
}

</mosaic_0001>

<llo_original>
// kernel: tpu_custom_call.1
$region0: #{tpu_custom_call.1}
  #allocation0 [shape = 'u32[]', space=smem, size = 0x4, offset = 0x4, fixed_abs, tag = 'smem constant byte address 0x4 - core index']
  #allocation1 [shape = 'u32[144,128]{1,0:T(1,128)}', space=vmem, size = 0x12000, scoped, tag = 'internal scratch']
  #allocation2 [shape = 'f32[256,256]{1,0:T(8,128)}', space=vmem, size = 0x40000, scoped, tag = 'scratch operand']
  %s0 = inlined_call_operand.hbm [shape: f32[256,256], index: 0, kind: input, shape index: {}]
  %s1 = inlined_call_operand.hbm [shape: f32[256,768], index: 1, kind: input, shape index: {}]
  %s2 = inlined_call_operand.hbm [shape: f32[256,768], index: 2, kind: output, shape index: {}]
  %s3 = sld [smem:[#allocation0]]
  $region57: #{tpu_custom_call.1} parent=0
    _
  %s5 = ssub.s32 1, %s3
  %s6 = scalar_select 0, %s5, %s3
  $region1: #{tpu_custom_call.1} parent=0
    #allocation3 [shape = 'u8[262144]{0}', space=vmem, size = 0x40000, scoped, tag = 'input window, operand 0, single buffered']
    #allocation4 [shape = 's32[2]{0}', space=sflag, size = 0x8, scoped, tag = 'scoped memory for tpu_custom_call.1']
    #allocation5 [shape = 's32[2]{0}', space=sflag, size = 0x8, scoped, tag = 'scoped memory for tpu_custom_call.1']
    #allocation6 [shape = 'u8[524288]{0}', space=vmem, size = 0x80000, scoped, tag = 'input window, operand 1']
    #allocation7 [shape = 's32[2]{0}', space=sflag, size = 0x8, scoped, tag = 'scoped memory for tpu_custom_call.1']
    #allocation8 [shape = 'u8[524288]{0}', space=vmem, size = 0x80000, scoped, tag = 'output window, operand 0']
    %7 = vsyncpa [#allocation4], 0
    %8 = vsyncpa [#allocation7], 0
    %s9 = scalar_lea.sflag [#allocation7], 1
    %10 = vsyncpa %s9, 0
    %11 = vsyncpa [#allocation5], 0
    %s12 = scalar_lea.sflag [#allocation5], 1
    %13 = vsyncpa %s12, 0
    loop: start=0, step=1, limit=5
    $region2: #{tpu_custom_call.1} parent=1 // loop_pre_header
      _
    $region3: #{tpu_custom_call.1} parent=1 // loop_header
      %s15 = sphi 0, %s19
      %p16 = scmp.ge.s32.totalorder %s15, 5
      %s22 = sphi 0, %s41
      %s23 = sphi 0, %s37
      %s24 = sphi 0, %s33
      %s25 = sphi 0, %s22
      %s26 = sphi 0, %s23
      %s27 = sphi 0, %s24
      %s28 = sphi 0, %s25
      %s29 = sphi 0, %s26
      %s30 = sphi 0, %s27
      %s46 = sphi 0, %s48
      %s49 = sphi 0, %s46
      %s50 = sphi 0, %s49
      %s66 = sphi 0, %s50
      %s74 = sphi 0, %s76
      %s77 = sphi 0, %s74
      %s78 = sphi 0, %s77
      %s94 = sphi 0, %s78
      %s102 = sphi 0, %s104
      %s105 = sphi 0, %s102
      %s106 = sphi 0, %s105
      %s122 = sphi 0, %s106
    $region4: #{tpu_custom_call.1} parent=1 // loop_header_branch
      %18 = sbr.rel (%p16) target = $region8
    $region5: #{tpu_custom_call.1} parent=1 // loop_body
      %s20 = ssub.s32 %s15, 1
      %s21 = ssub.s32 %s15, 2
      %s31 = sadd.s32 1, %s24
      %p32 = scmp.ge.s32.totalorder %s31, 1
      %s33 = scalar_select %p32, 0, %s31
      %s34 = sadd.s32 1, %s23
      %s35 = scalar_select %p32, %s34, %s23
      %p36 = scmp.ge.s32.totalorder %s35, 3
      %s37 = scalar_select %p36, 0, %s35
      %s38 = sadd.s32 1, %s22
      %s39 = scalar_select %p36, %s38, %s22
      %p40 = scmp.ge.s32.totalorder %s39, 1
      %s41 = scalar_select %p40, 0, %s39
      %s42 = ssub.s32 %s22, %s41
      %s43 = ssub.s32 %s24, %s33
      %s44 = sor.u32 %s42, %s43
      %p45 = scmp.eq.s32.totalorder %s44, 0
      %s47 = sadd.s32 %s46, 1
      %s48 = scalar_select %p45, %s46, %s47
      %p51 = pneg %p45
      %p52 = scmp.eq.s32.totalorder %s15, 2
      %p53 = por %p51, %p52
      %p54 = scmp.ne.s32.totalorder %s46, %s49
      %p55 = scmp.eq.s32.totalorder %s15, 0
      %p56 = por %p54, %p55
      %p57 = scmp.ne.s32.totalorder %s46, %s49
      %p58 = scmp.eq.s32.totalorder %s20, 2
      %p59 = por %p57, %p58
      %p60 = scmp.ne.s32.totalorder %s49, %s50
      %p61 = scmp.eq.s32.totalorder %s20, 0
      %p62 = por %p60, %p61
      %p63 = scmp.ne.s32.totalorder %s49, %s50
      %p64 = scmp.eq.s32.totalorder %s21, 2
      %p65 = por %p63, %p64
      %p67 = scmp.ne.s32.totalorder %s50, %s66
      %p68 = scmp.eq.s32.totalorder %s21, 0
      %p69 = por %p67, %p68
      %s70 = ssub.s32 %s24, %s33
      %s71 = ssub.s32 %s23, %s37
      %s72 = sor.u32 %s70, %s71
      %p73 = scmp.eq.s32.totalorder %s72, 0
      %s75 = sadd.s32 %s74, 1
      %s76 = scalar_select %p73, %s74, %s75
      %p79 = pneg %p73
      %p80 = scmp.eq.s32.totalorder %s15, 2
      %p81 = por %p79, %p80
      %p82 = scmp.ne.s32.totalorder %s74, %s77
      %p83 = scmp.eq.s32.totalorder %s15, 0
      %p84 = por %p82, %p83
      %p85 = scmp.ne.s32.totalorder %s74, %s77
      %p86 = scmp.eq.s32.totalorder %s20, 2
      %p87 = por %p85, %p86
      %p88 = scmp.ne.s32.totalorder %s77, %s78
      %p89 = scmp.eq.s32.totalorder %s20, 0
      %p90 = por %p88, %p89
      %p91 = scmp.ne.s32.totalorder %s77, %s78
      %p92 = scmp.eq.s32.totalorder %s21, 2
      %p93 = por %p91, %p92
      %p95 = scmp.ne.s32.totalorder %s78, %s94
      %p96 = scmp.eq.s32.totalorder %s21, 0
      %p97 = por %p95, %p96
      %s98 = ssub.s32 %s22, %s41
      %s99 = ssub.s32 %s23, %s37
      %s100 = sor.u32 %s98, %s99
      %p101 = scmp.eq.s32.totalorder %s100, 0
      %s103 = sadd.s32 %s102, 1
      %s104 = scalar_select %p101, %s102, %s103
      %p107 = pneg %p101
      %p108 = scmp.eq.s32.totalorder %s15, 2
      %p109 = por %p107, %p108
      %p110 = scmp.ne.s32.totalorder %s102, %s105
      %p111 = scmp.eq.s32.totalorder %s15, 0
      %p112 = por %p110, %p111
      %p113 = scmp.ne.s32.totalorder %s102, %s105
      %p114 = scmp.eq.s32.totalorder %s20, 2
      %p115 = por %p113, %p114
      %p116 = scmp.ne.s32.totalorder %s105, %s106
      %p117 = scmp.eq.s32.totalorder %s20, 0
      %p118 = por %p116, %p117
      %p119 = scmp.ne.s32.totalorder %s105, %s106
      %p120 = scmp.eq.s32.totalorder %s21, 2
      %p121 = por %p119, %p120
      %p123 = scmp.ne.s32.totalorder %s106, %s122
      %p124 = scmp.eq.s32.totalorder %s21, 0
      %p125 = por %p123, %p124
      %p126 = scmp.le.s32.totalorder 1, %s15
      %p127 = scmp.lt.s32.totalorder %s15, 4
      %p128 = pnand %p126, %p127
      %p129 = pneg %p128
      // Predicated region
      $region9: #{tpu_custom_call.1} parent=5 // pred_check
        _
      $region10: #{tpu_custom_call.1} parent=5 // pred_check_branch
        %131 = sbr.rel (%p128) target = $region12
      $region11: #{tpu_custom_call.1} parent=5 // pred_region
        %s132 = ssub.s32 %s15, 1
        // Predicated region
        $region13: #{tpu_custom_call.1} parent=11 // pred_check
          %p133 = pneg %p62
        $region14: #{tpu_custom_call.1} parent=11 // pred_check_branch
          %135 = sbr.rel (%p133) target = $region16
        $region15: #{tpu_custom_call.1} parent=11 // pred_region
          %s136 = smul.u32 32, %s25
          %s137 = smul.u32 2, %s27
          %s139 = ssub.s32 8192, 8192
          %140 = vsyncadd [#allocation4], %s139
          %s141 = smul.addr %s136, 2
          %s142 = sadd.s32 %s137, %s141
          %s143 = smul.addr %s142, 128
          %s144 = scalar_lea.hbm %s0, %s143
          %s145 = sshll.u32 [#allocation3], 4
          %s146 = int_to_ptr.vmem [resolvable:$true] %s145
          %151 = dma.hbm_to_vmem [thread:$0]  %s144, 8192, %s146, [#allocation4], 256, 256, 16
        $region16: #{tpu_custom_call.1} parent=11 // pred_fallthru
          _
      $region12: #{tpu_custom_call.1} parent=5 // pred_fallthru
        _
      %p152 = scmp.lt.s32.totalorder %s15, 3
      // Predicated region
      $region17: #{tpu_custom_call.1} parent=5 // pred_check
        %p153 = pneg %p152
      $region18: #{tpu_custom_call.1} parent=5 // pred_check_branch
        %155 = sbr.rel (%p153) target = $region20
      $region19: #{tpu_custom_call.1} parent=5 // pred_region
        // Predicated region
        $region21: #{tpu_custom_call.1} parent=19 // pred_check
          %p156 = pneg %p84
        $region22: #{tpu_custom_call.1} parent=19 // pred_check_branch
          %158 = sbr.rel (%p156) target = $region24
        $region23: #{tpu_custom_call.1} parent=19 // pred_region
          %s159 = sand.u32 %s74, 1
          %s160 = scalar_lea.sflag [#allocation7], %s159
          %s161 = sand.u32 %s74, 1
          %s162 = smul.addr %s161, 512
          %s163 = scalar_lea.vmem [#allocation6], %s162
          %s164 = smul.u32 32, %s24
          %s165 = smul.u32 2, %s23
          %s167 = ssub.s32 8192, 8192
          %168 = vsyncadd %s160, %s167
          %s169 = smul.addr %s164, 6
          %s170 = sadd.s32 %s165, %s169
          %s171 = smul.addr %s170, 128
          %s172 = scalar_lea.hbm %s1, %s171
          %s173 = sshll.u32 %s163, 4
          %s174 = int_to_ptr.vmem [resolvable:$true] %s173
          %179 = dma.hbm_to_vmem [thread:$0]  %s172, 8192, %s174, %s160, 768, 256, 16
        $region24: #{tpu_custom_call.1} parent=19 // pred_fallthru
          _
      $region20: #{tpu_custom_call.1} parent=5 // pred_fallthru
        _
      %p180 = scmp.le.s32.totalorder 1, %s15
      %p181 = scmp.lt.s32.totalorder %s15, 4
      %p182 = pnand %p180, %p181
      %p183 = pneg %p182
      // Predicated region
      $region25: #{tpu_custom_call.1} parent=5 // pred_check
        _
      $region26: #{tpu_custom_call.1} parent=5 // pred_check_branch
        %185 = sbr.rel (%p182) target = $region28
      $region27: #{tpu_custom_call.1} parent=5 // pred_region
        %s186 = ssub.s32 %s15, 1
        // Predicated region
        $region29: #{tpu_custom_call.1} parent=27 // pred_check
          %p187 = pneg %p62
        $region30: #{tpu_custom_call.1} parent=27 // pred_check_branch
          %189 = sbr.rel (%p187) target = $region32
        $region31: #{tpu_custom_call.1} parent=27 // pred_region
          %190 = dma.done [#allocation4], 8192
        $region32: #{tpu_custom_call.1} parent=27 // pred_fallthru
          _
        %s191 = sand.u32 %s77, 1
        %s192 = scalar_lea.sflag [#allocation7], %s191
        %s193 = sand.u32 %s77, 1
        %s194 = smul.addr %s193, 512
        %s195 = scalar_lea.vmem [#allocation6], %s194
        // Predicated region
        $region33: #{tpu_custom_call.1} parent=27 // pred_check
          %p196 = pneg %p90
        $region34: #{tpu_custom_call.1} parent=27 // pred_check_branch
          %198 = sbr.rel (%p196) target = $region36
        $region35: #{tpu_custom_call.1} parent=27 // pred_region
          %199 = dma.done %s192, 8192
        $region36: #{tpu_custom_call.1} parent=27 // pred_fallthru
          _
        %p200 = pneg %p62
        %p201 = pneg %p59
        %s202 = sand.u32 %s77, 1
        %s203 = scalar_lea.sflag [#allocation7], %s202
        %s204 = sand.u32 %s77, 1
        %s205 = smul.addr %s204, 512
        %s206 = scalar_lea.vmem [#allocation6], %s205
        %p207 = pneg %p90
        %p208 = pneg %p87
        %p209 = pneg %p118
        %p210 = pneg %p115
        %s211 = sand.u32 %s105, 1
        %s212 = scalar_lea.sflag [#allocation5], %s211
        %s213 = sand.u32 %s105, 1
        %s214 = smul.addr %s213, 512
        %s215 = scalar_lea.vmem [#allocation8], %s214
        %s216 = smul.u32 32, %s25
        %s217 = smul.u32 2, %s27
        %s218 = smul.u32 32, %s27
        %s219 = smul.u32 2, %s26
        %s220 = smul.u32 32, %s25
        %s221 = smul.u32 2, %s26
        %p222 = scmp.eq.s32.totalorder %s27, 0
        // Predicated region
        $region37: #{tpu_custom_call.1} parent=27 // pred_check
          %p223 = pneg %p222
        $region38: #{tpu_custom_call.1} parent=27 // pred_check_branch
          %225 = sbr.rel (%p223) target = $region40
        $region39: #{tpu_custom_call.1} parent=27 // pred_region
          %226 = vst [vmem:[#allocation2] sm:$0xff] 0.0
          %227 = vst [vmem:[#allocation2 + $0x8] sm:$0xff] 0.0
          %228 = vst [vmem:[#allocation2 + $0x10] sm:$0xff] 0.0
          %229 = vst [vmem:[#allocation2 + $0x18] sm:$0xff] 0.0
          %230 = vst [vmem:[#allocation2 + $0x20] sm:$0xff] 0.0
          %231 = vst [vmem:[#allocation2 + $0x28] sm:$0xff] 0.0
          %232 = vst [vmem:[#allocation2 + $0x30] sm:$0xff] 0.0
          %233 = vst [vmem:[#allocation2 + $0x38] sm:$0xff] 0.0
          %234 = vst [vmem:[#allocation2 + $0x40] sm:$0xff] 0.0
          %235 = vst [vmem:[#allocation2 + $0x48] sm:$0xff] 0.0
          %236 = vst [vmem:[#allocation2 + $0x50] sm:$0xff] 0.0
          %237 = vst [vmem:[#allocation2 + $0x58] sm:$0xff] 0.0
          %238 = vst [vmem:[#allocation2 + $0x60] sm:$0xff] 0.0
          %239 = vst [vmem:[#allocation2 + $0x68] sm:$0xff] 0.0
          %240 = vst [vmem:[#allocation2 + $0x70] sm:$0xff] 0.0
          %241 = vst [vmem:[#allocation2 + $0x78] sm:$0xff] 0.0
          %242 = vst [vmem:[#allocation2 + $0x80] sm:$0xff] 0.0
          %243 = vst [vmem:[#allocation2 + $0x88] sm:$0xff] 0.0
          %244 = vst [vmem:[#allocation2 + $0x90] sm:$0xff] 0.0
          %245 = vst [vmem:[#allocation2 + $0x98] sm:$0xff] 0.0
          %246 = vst [vmem:[#allocation2 + $0xa0] sm:$0xff] 0.0
          %247 = vst [vmem:[#allocation2 + $0xa8] sm:$0xff] 0.0
          %248 = vst [vmem:[#allocation2 + $0xb0] sm:$0xff] 0.0
          %249 = vst [vmem:[#allocation2 + $0xb8] sm:$0xff] 0.0
          %250 = vst [vmem:[#allocation2 + $0xc0] sm:$0xff] 0.0
          %251 = vst [vmem:[#allocation2 + $0xc8] sm:$0xff] 0.0
          %252 = vst [vmem:[#allocation2 + $0xd0] sm:$0xff] 0.0
          %253 = vst [vmem:[#allocation2 + $0xd8] sm:$0xff] 0.0
          %254 = vst [vmem:[#allocation2 + $0xe0] sm:$0xff] 0.0
          %255 = vst [vmem:[#allocation2 + $0xe8] sm:$0xff] 0.0
          %256 = vst [vmem:[#allocation2 + $0xf0] sm:$0xff] 0.0
          %257 = vst [vmem:[#allocation2 + $0xf8] sm:$0xff] 0.0
          %258 = vst [vmem:[#allocation2 + $0x100] sm:$0xff] 0.0
          %259 = vst [vmem:[#allocation2 + $0x108] sm:$0xff] 0.0
          %260 = vst [vmem:[#allocation2 + $0x110] sm:$0xff] 0.0
          %261 = vst [vmem:[#allocation2 + $0x118] sm:$0xff] 0.0
          %262 = vst [vmem:[#allocation2 + $0x120] sm:$0xff] 0.0
          %263 = vst [vmem:[#allocation2 + $0x128] sm:$0xff] 0.0
          %264 = vst [vmem:[#allocation2 + $0x130] sm:$0xff] 0.0
          %265 = vst [vmem:[#allocation2 + $0x138] sm:$0xff] 0.0
          %266 = vst [vmem:[#allocation2 + $0x140] sm:$0xff] 0.0
          %267 = vst [vmem:[#allocation2 + $0x148] sm:$0xff] 0.0
          %268 = vst [vmem:[#allocation2 + $0x150] sm:$0xff] 0.0
          %269 = vst [vmem:[#allocation2 + $0x158] sm:$0xff] 0.0
          %270 = vst [vmem:[#allocation2 + $0x160] sm:$0xff] 0.0
          %271 = vst [vmem:[#allocation2 + $0x168] sm:$0xff] 0.0
          %272 = vst [vmem:[#allocation2 + $0x170] sm:$0xff] 0.0
          %273 = vst [vmem:[#allocation2 + $0x178] sm:$0xff] 0.0
          %274 = vst [vmem:[#allocation2 + $0x180] sm:$0xff] 0.0
          %275 = vst [vmem:[#allocation2 + $0x188] sm:$0xff] 0.0
          %276 = vst [vmem:[#allocation2 + $0x190] sm:$0xff] 0.0
          %277 = vst [vmem:[#allocation2 + $0x198] sm:$0xff] 0.0
          %278 = vst [vmem:[#allocation2 + $0x1a0] sm:$0xff] 0.0
          %279 = vst [vmem:[#allocation2 + $0x1a8] sm:$0xff] 0.0
          %280 = vst [vmem:[#allocation2 + $0x1b0] sm:$0xff] 0.0
          %281 = vst [vmem:[#allocation2 + $0x1b8] sm:$0xff] 0.0
          %282 = vst [vmem:[#allocation2 + $0x1c0] sm:$0xff] 0.0
          %283 = vst [vmem:[#allocation2 + $0x1c8] sm:$0xff] 0.0
          %284 = vst [vmem:[#allocation2 + $0x1d0] sm:$0xff] 0.0
          %285 = vst [vmem:[#allocation2 + $0x1d8] sm:$0xff] 0.0
          %286 = vst [vmem:[#allocation2 + $0x1e0] sm:$0xff] 0.0
          %287 = vst [vmem:[#allocation2 + $0x1e8] sm:$0xff] 0.0
          %288 = vst [vmem:[#allocation2 + $0x1f0] sm:$0xff] 0.0
          %289 = vst [vmem:[#allocation2 + $0x1f8] sm:$0xff] 0.0
        $region40: #{tpu_custom_call.1} parent=27 // pred_fallthru
          _
        %v290 = vld [vmem:[#allocation2] sm:$0xff]
        %v291 = vld [vmem:[#allocation2 + $0x8] sm:$0xff]
        %v292 = vld [vmem:[#allocation2 + $0x10] sm:$0xff]
        %v293 = vld [vmem:[#allocation2 + $0x18] sm:$0xff]
        %v294 = vld [vmem:[#allocation2 + $0x20] sm:$0xff]
        %v295 = vld [vmem:[#allocation2 + $0x28] sm:$0xff]
        %v296 = vld [vmem:[#allocation2 + $0x30] sm:$0xff]
        %v297 = vld [vmem:[#allocation2 + $0x38] sm:$0xff]
        %v298 = vld [vmem:[#allocation2 + $0x40] sm:$0xff]
        %v299 = vld [vmem:[#allocation2 + $0x48] sm:$0xff]
        %v300 = vld [vmem:[#allocation2 + $0x50] sm:$0xff]
        %v301 = vld [vmem:[#allocation2 + $0x58] sm:$0xff]
        %v302 = vld [vmem:[#allocation2 + $0x60] sm:$0xff]
        %v303 = vld [vmem:[#allocation2 + $0x68] sm:$0xff]
        %v304 = vld [vmem:[#allocation2 + $0x70] sm:$0xff]
        %v305 = vld [vmem:[#allocation2 + $0x78] sm:$0xff]
        %v306 = vld [vmem:[#allocation2 + $0x80] sm:$0xff]
        %v307 = vld [vmem:[#allocation2 + $0x88] sm:$0xff]
        %v308 = vld [vmem:[#allocation2 + $0x90] sm:$0xff]
        %v309 = vld [vmem:[#allocation2 + $0x98] sm:$0xff]
        %v310 = vld [vmem:[#allocation2 + $0xa0] sm:$0xff]
        %v311 = vld [vmem:[#allocation2 + $0xa8] sm:$0xff]
        %v312 = vld [vmem:[#allocation2 + $0xb0] sm:$0xff]
        %v313 = vld [vmem:[#allocation2 + $0xb8] sm:$0xff]
        %v314 = vld [vmem:[#allocation2 + $0xc0] sm:$0xff]
        %v315 = vld [vmem:[#allocation2 + $0xc8] sm:$0xff]
        %v316 = vld [vmem:[#allocation2 + $0xd0] sm:$0xff]
        %v317 = vld [vmem:[#allocation2 + $0xd8] sm:$0xff]
        %v318 = vld [vmem:[#allocation2 + $0xe0] sm:$0xff]
        %v319 = vld [vmem:[#allocation2 + $0xe8] sm:$0xff]
        %v320 = vld [vmem:[#allocation2 + $0xf0] sm:$0xff]
        %v321 = vld [vmem:[#allocation2 + $0xf8] sm:$0xff]
        %v322 = vld [vmem:[#allocation2 + $0x100] sm:$0xff]
        %v323 = vld [vmem:[#allocation2 + $0x108] sm:$0xff]
        %v324 = vld [vmem:[#allocation2 + $0x110] sm:$0xff]
        %v325 = vld [vmem:[#allocation2 + $0x118] sm:$0xff]
        %v326 = vld [vmem:[#allocation2 + $0x120] sm:$0xff]
        %v327 = vld [vmem:[#allocation2 + $0x128] sm:$0xff]
        %v328 = vld [vmem:[#allocation2 + $0x130] sm:$0xff]
        %v329 = vld [vmem:[#allocation2 + $0x138] sm:$0xff]
        %v330 = vld [vmem:[#allocation2 + $0x140] sm:$0xff]
        %v331 = vld [vmem:[#allocation2 + $0x148] sm:$0xff]
        %v332 = vld [vmem:[#allocation2 + $0x150] sm:$0xff]
        %v333 = vld [vmem:[#allocation2 + $0x158] sm:$0xff]
        %v334 = vld [vmem:[#allocation2 + $0x160] sm:$0xff]
        %v335 = vld [vmem:[#allocation2 + $0x168] sm:$0xff]
        %v336 = vld [vmem:[#allocation2 + $0x170] sm:$0xff]
        %v337 = vld [vmem:[#allocation2 + $0x178] sm:$0xff]
        %v338 = vld [vmem:[#allocation2 + $0x180] sm:$0xff]
        %v339 = vld [vmem:[#allocation2 + $0x188] sm:$0xff]
        %v340 = vld [vmem:[#allocation2 + $0x190] sm:$0xff]
        %v341 = vld [vmem:[#allocation2 + $0x198] sm:$0xff]
        %v342 = vld [vmem:[#allocation2 + $0x1a0] sm:$0xff]
        %v343 = vld [vmem:[#allocation2 + $0x1a8] sm:$0xff]
        %v344 = vld [vmem:[#allocation2 + $0x1b0] sm:$0xff]
        %v345 = vld [vmem:[#allocation2 + $0x1b8] sm:$0xff]
        %v346 = vld [vmem:[#allocation2 + $0x1c0] sm:$0xff]
        %v347 = vld [vmem:[#allocation2 + $0x1c8] sm:$0xff]
        %v348 = vld [vmem:[#allocation2 + $0x1d0] sm:$0xff]
        %v349 = vld [vmem:[#allocation2 + $0x1d8] sm:$0xff]
        %v350 = vld [vmem:[#allocation2 + $0x1e0] sm:$0xff]
        %v351 = vld [vmem:[#allocation2 + $0x1e8] sm:$0xff]
        %v352 = vld [vmem:[#allocation2 + $0x1f0] sm:$0xff]
        %v353 = vld [vmem:[#allocation2 + $0x1f8] sm:$0xff]
        %v354 = vld [vmem:[#allocation3] sm:$0xff]
        %v355 = vld [vmem:[#allocation3 + $0x8] sm:$0xff]
        %v356 = vld [vmem:[#allocation3 + $0x10] sm:$0xff]
        %v357 = vld [vmem:[#allocation3 + $0x18] sm:$0xff]
        %v358 = vld [vmem:[#allocation3 + $0x20] sm:$0xff]
        %v359 = vld [vmem:[#allocation3 + $0x28] sm:$0xff]
        %v360 = vld [vmem:[#allocation3 + $0x30] sm:$0xff]
        %v361 = vld [vmem:[#allocation3 + $0x38] sm:$0xff]
        %v362 = vld [vmem:[#allocation3 + $0x40] sm:$0xff]
        %v363 = vld [vmem:[#allocation3 + $0x48] sm:$0xff]
        %v364 = vld [vmem:[#allocation3 + $0x50] sm:$0xff]
        %v365 = vld [vmem:[#allocation3 + $0x58] sm:$0xff]
        %v366 = vld [vmem:[#allocation3 + $0x60] sm:$0xff]
        %v367 = vld [vmem:[#allocation3 + $0x68] sm:$0xff]
        %v368 = vld [vmem:[#allocation3 + $0x70] sm:$0xff]
        %v369 = vld [vmem:[#allocation3 + $0x78] sm:$0xff]
        %v370 = vld [vmem:[#allocation3 + $0x80] sm:$0xff]
        %v371 = vld [vmem:[#allocation3 + $0x88] sm:$0xff]
        %v372 = vld [vmem:[#allocation3 + $0x90] sm:$0xff]
        %v373 = vld [vmem:[#allocation3 + $0x98] sm:$0xff]
        %v374 = vld [vmem:[#allocation3 + $0xa0] sm:$0xff]
        %v375 = vld [vmem:[#allocation3 + $0xa8] sm:$0xff]
        %v376 = vld [vmem:[#allocation3 + $0xb0] sm:$0xff]
        %v377 = vld [vmem:[#allocation3 + $0xb8] sm:$0xff]
        %v378 = vld [vmem:[#allocation3 + $0xc0] sm:$0xff]
        %v379 = vld [vmem:[#allocation3 + $0xc8] sm:$0xff]
        %v380 = vld [vmem:[#allocation3 + $0xd0] sm:$0xff]
        %v381 = vld [vmem:[#allocation3 + $0xd8] sm:$0xff]
        %v382 = vld [vmem:[#allocation3 + $0xe0] sm:$0xff]
        %v383 = vld [vmem:[#allocation3 + $0xe8] sm:$0xff]
        %v384 = vld [vmem:[#allocation3 + $0xf0] sm:$0xff]
        %v385 = vld [vmem:[#allocation3 + $0xf8] sm:$0xff]
        %v386 = vld [vmem:[#allocation3 + $0x100] sm:$0xff]
        %v387 = vld [vmem:[#allocation3 + $0x108] sm:$0xff]
        %v388 = vld [vmem:[#allocation3 + $0x110] sm:$0xff]
        %v389 = vld [vmem:[#allocation3 + $0x118] sm:$0xff]
        %v390 = vld [vmem:[#allocation3 + $0x120] sm:$0xff]
        %v391 = vld [vmem:[#allocation3 + $0x128] sm:$0xff]
        %v392 = vld [vmem:[#allocation3 + $0x130] sm:$0xff]
        %v393 = vld [vmem:[#allocation3 + $0x138] sm:$0xff]
        %v394 = vld [vmem:[#allocation3 + $0x140] sm:$0xff]
        %v395 = vld [vmem:[#allocation3 + $0x148] sm:$0xff]
        %v396 = vld [vmem:[#allocation3 + $0x150] sm:$0xff]
        %v397 = vld [vmem:[#allocation3 + $0x158] sm:$0xff]
        %v398 = vld [vmem:[#allocation3 + $0x160] sm:$0xff]
        %v399 = vld [vmem:[#allocation3 + $0x168] sm:$0xff]
        %v400 = vld [vmem:[#allocation3 + $0x170] sm:$0xff]
        %v401 = vld [vmem:[#allocation3 + $0x178] sm:$0xff]
        %v402 = vld [vmem:[#allocation3 + $0x180] sm:$0xff]
        %v403 = vld [vmem:[#allocation3 + $0x188] sm:$0xff]
        %v404 = vld [vmem:[#allocation3 + $0x190] sm:$0xff]
        %v405 = vld [vmem:[#allocation3 + $0x198] sm:$0xff]
        %v406 = vld [vmem:[#allocation3 + $0x1a0] sm:$0xff]
        %v407 = vld [vmem:[#allocation3 + $0x1a8] sm:$0xff]
        %v408 = vld [vmem:[#allocation3 + $0x1b0] sm:$0xff]
        %v409 = vld [vmem:[#allocation3 + $0x1b8] sm:$0xff]
        %v410 = vld [vmem:[#allocation3 + $0x1c0] sm:$0xff]
        %v411 = vld [vmem:[#allocation3 + $0x1c8] sm:$0xff]
        %v412 = vld [vmem:[#allocation3 + $0x1d0] sm:$0xff]
        %v413 = vld [vmem:[#allocation3 + $0x1d8] sm:$0xff]
        %v414 = vld [vmem:[#allocation3 + $0x1e0] sm:$0xff]
        %v415 = vld [vmem:[#allocation3 + $0x1e8] sm:$0xff]
        %v416 = vld [vmem:[#allocation3 + $0x1f0] sm:$0xff]
        %v417 = vld [vmem:[#allocation3 + $0x1f8] sm:$0xff]
        %v418 = vld [vmem:[%s195] sm:$0xff]
        %v419 = vld [vmem:[%s195 + $0x8] sm:$0xff]
        %v420 = vld [vmem:[%s195 + $0x10] sm:$0xff]
        %v421 = vld [vmem:[%s195 + $0x18] sm:$0xff]
        %v422 = vld [vmem:[%s195 + $0x20] sm:$0xff]
        %v423 = vld [vmem:[%s195 + $0x28] sm:$0xff]
        %v424 = vld [vmem:[%s195 + $0x30] sm:$0xff]
        %v425 = vld [vmem:[%s195 + $0x38] sm:$0xff]
        %v426 = vld [vmem:[%s195 + $0x40] sm:$0xff]
        %v427 = vld [vmem:[%s195 + $0x48] sm:$0xff]
        %v428 = vld [vmem:[%s195 + $0x50] sm:$0xff]
        %v429 = vld [vmem:[%s195 + $0x58] sm:$0xff]
        %v430 = vld [vmem:[%s195 + $0x60] sm:$0xff]
        %v431 = vld [vmem:[%s195 + $0x68] sm:$0xff]
        %v432 = vld [vmem:[%s195 + $0x70] sm:$0xff]
        %v433 = vld [vmem:[%s195 + $0x78] sm:$0xff]
        %v434 = vld [vmem:[%s195 + $0x80] sm:$0xff]
        %v435 = vld [vmem:[%s195 + $0x88] sm:$0xff]
        %v436 = vld [vmem:[%s195 + $0x90] sm:$0xff]
        %v437 = vld [vmem:[%s195 + $0x98] sm:$0xff]
        %v438 = vld [vmem:[%s195 + $0xa0] sm:$0xff]
        %v439 = vld [vmem:[%s195 + $0xa8] sm:$0xff]
        %v440 = vld [vmem:[%s195 + $0xb0] sm:$0xff]
        %v441 = vld [vmem:[%s195 + $0xb8] sm:$0xff]
        %v442 = vld [vmem:[%s195 + $0xc0] sm:$0xff]
        %v443 = vld [vmem:[%s195 + $0xc8] sm:$0xff]
        %v444 = vld [vmem:[%s195 + $0xd0] sm:$0xff]
        %v445 = vld [vmem:[%s195 + $0xd8] sm:$0xff]
        %v446 = vld [vmem:[%s195 + $0xe0] sm:$0xff]
        %v447 = vld [vmem:[%s195 + $0xe8] sm:$0xff]
        %v448 = vld [vmem:[%s195 + $0xf0] sm:$0xff]
        %v449 = vld [vmem:[%s195 + $0xf8] sm:$0xff]
        %v450 = vld [vmem:[%s195 + $0x100] sm:$0xff]
        %v451 = vld [vmem:[%s195 + $0x108] sm:$0xff]
        %v452 = vld [vmem:[%s195 + $0x110] sm:$0xff]
        %v453 = vld [vmem:[%s195 + $0x118] sm:$0xff]
        %v454 = vld [vmem:[%s195 + $0x120] sm:$0xff]
        %v455 = vld [vmem:[%s195 + $0x128] sm:$0xff]
        %v456 = vld [vmem:[%s195 + $0x130] sm:$0xff]
        %v457 = vld [vmem:[%s195 + $0x138] sm:$0xff]
        %v458 = vld [vmem:[%s195 + $0x140] sm:$0xff]
        %v459 = vld [vmem:[%s195 + $0x148] sm:$0xff]
        %v460 = vld [vmem:[%s195 + $0x150] sm:$0xff]
        %v461 = vld [vmem:[%s195 + $0x158] sm:$0xff]
        %v462 = vld [vmem:[%s195 + $0x160] sm:$0xff]
        %v463 = vld [vmem:[%s195 + $0x168] sm:$0xff]
        %v464 = vld [vmem:[%s195 + $0x170] sm:$0xff]
        %v465 = vld [vmem:[%s195 + $0x178] sm:$0xff]
        %v466 = vld [vmem:[%s195 + $0x180] sm:$0xff]
        %v467 = vld [vmem:[%s195 + $0x188] sm:$0xff]
        %v468 = vld [vmem:[%s195 + $0x190] sm:$0xff]
        %v469 = vld [vmem:[%s195 + $0x198] sm:$0xff]
        %v470 = vld [vmem:[%s195 + $0x1a0] sm:$0xff]
        %v471 = vld [vmem:[%s195 + $0x1a8] sm:$0xff]
        %v472 = vld [vmem:[%s195 + $0x1b0] sm:$0xff]
        %v473 = vld [vmem:[%s195 + $0x1b8] sm:$0xff]
        %v474 = vld [vmem:[%s195 + $0x1c0] sm:$0xff]
        %v475 = vld [vmem:[%s195 + $0x1c8] sm:$0xff]
        %v476 = vld [vmem:[%s195 + $0x1d0] sm:$0xff]
        %v477 = vld [vmem:[%s195 + $0x1d8] sm:$0xff]
        %v478 = vld [vmem:[%s195 + $0x1e0] sm:$0xff]
        %v479 = vld [vmem:[%s195 + $0x1e8] sm:$0xff]
        %v480 = vld [vmem:[%s195 + $0x1f0] sm:$0xff]
        %v481 = vld [vmem:[%s195 + $0x1f8] sm:$0xff]
        %482 = vmatprep.subr.mxu0 %v419
        %483 = vmatpush1.msra.mxu0 %v418
        %484 = vmatprep.subr.mxu0 %v421
        %485 = vmatpush1.msra.mxu0 %v420
        %486 = vmatprep.subr.mxu0 %v423
        %487 = vmatpush1.msra.mxu0 %v422
        %488 = vmatprep.subr.mxu0 %v425
        %489 = vmatpush1.msra.mxu0 %v424
        %490 = vmatprep.subr.mxu0 %v427
        %491 = vmatpush1.msra.mxu0 %v426
        %492 = vmatprep.subr.mxu0 %v429
        %493 = vmatpush1.msra.mxu0 %v428
        %494 = vmatprep.subr.mxu0 %v431
        %495 = vmatpush1.msra.mxu0 %v430
        %496 = vmatprep.subr.mxu0 %v433
        %497 = vmatpush1.msra.mxu0 %v432
        %498 = vmatprep.subr.mxu0 %v435
        %499 = vmatpush1.msra.mxu0 %v434
        %500 = vmatprep.subr.mxu0 %v437
        %501 = vmatpush1.msra.mxu0 %v436
        %502 = vmatprep.subr.mxu0 %v439
        %503 = vmatpush1.msra.mxu0 %v438
        %504 = vmatprep.subr.mxu0 %v441
        %505 = vmatpush1.msra.mxu0 %v440
        %506 = vmatprep.subr.mxu0 %v443
        %507 = vmatpush1.msra.mxu0 %v442
        %508 = vmatprep.subr.mxu0 %v445
        %509 = vmatpush1.msra.mxu0 %v444
        %510 = vmatprep.subr.mxu0 %v447
        %511 = vmatpush1.msra.mxu0 %v446
        %512 = vmatprep.subr.mxu0 %v449
        %513 = vmatpush1.msra.mxu0 %v448
        %514 = vmatprep.subr.mxu0 %v451
        %515 = vmatpush1.msra.mxu0 %v450
        %516 = vmatprep.subr.mxu0 %v453
        %517 = vmatpush1.msra.mxu0 %v452
        %518 = vmatprep.subr.mxu0 %v455
        %519 = vmatpush1.msra.mxu0 %v454
        %520 = vmatprep.subr.mxu0 %v457
        %521 = vmatpush1.msra.mxu0 %v456
        %522 = vmatprep.subr.mxu0 %v459
        %523 = vmatpush1.msra.mxu0 %v458
        %524 = vmatprep.subr.mxu0 %v461
        %525 = vmatpush1.msra.mxu0 %v460
        %526 = vmatprep.subr.mxu0 %v463
        %527 = vmatpush1.msra.mxu0 %v462
        %528 = vmatprep.subr.mxu0 %v465
        %529 = vmatpush1.msra.mxu0 %v464
        %530 = vmatprep.subr.mxu0 %v467
        %531 = vmatpush1.msra.mxu0 %v466
        %532 = vmatprep.subr.mxu0 %v469
        %533 = vmatpush1.msra.mxu0 %v468
        %534 = vmatprep.subr.mxu0 %v471
        %535 = vmatpush1.msra.mxu0 %v470
        %536 = vmatprep.subr.mxu0 %v473
        %537 = vmatpush1.msra.mxu0 %v472
        %538 = vmatprep.subr.mxu0 %v475
        %539 = vmatpush1.msra.mxu0 %v474
        %540 = vmatprep.subr.mxu0 %v477
        %541 = vmatpush1.msra.mxu0 %v476
        %542 = vmatprep.subr.mxu0 %v479
        %543 = vmatpush1.msra.mxu0 %v478
        %544 = vmatprep.subr.mxu0 %v481
        %545 = vmatpush1.msra.mxu0 %v480
        %546 = vmatprep.mubr.f32.mxu0 %v355
        %547 = vmatmul.mubr.f32.gmra.mrb[0].mxu0 %v354
        %v548 = vpop.f32.mrb[0].mxu0
        %v549 = vadd.f32 0.0, %v548
        %v550 = vpop.f32.mrb[0].mxu0
        %v551 = vadd.f32 0.0, %v550
        %552 = vmatprep.mubr.f32.mxu0 %v357
        %553 = vmatmul.mubr.f32.gmra.mrb[0].mxu0 %v356
        %v554 = vpop.f32.mrb[0].mxu0
        %v555 = vadd.f32 0.0, %v554
        %v556 = vpop.f32.mrb[0].mxu0
        %v557 = vadd.f32 0.0, %v556
        %558 = vmatprep.mubr.f32.mxu0 %v359
        %559 = vmatmul.mubr.f32.gmra.mrb[0].mxu0 %v358
        %v560 = vpop.f32.mrb[0].mxu0
        %v561 = vadd.f32 0.0, %v560
        %v562 = vpop.f32.mrb[0].mxu0
        %v563 = vadd.f32 0.0, %v562
        %564 = vmatprep.mubr.f32.mxu0 %v361
        %565 = vmatmul.mubr.f32.gmra.mrb[0].mxu0 %v360
        %v566 = vpop.f32.mrb[0].mxu0
        %v567 = vadd.f32 0.0, %v566
        %v568 = vpop.f32.mrb[0].mxu0
        %v569 = vadd.f32 0.0, %v568
        %570 = vmatprep.mubr.f32.mxu0 %v363
        %571 = vmatmul.mubr.f32.gmra.mrb[0].mxu0 %v362
        %v572 = vpop.f32.mrb[0].mxu0
        %v573 = vadd.f32 0.0, %v572
        %v574 = vpop.f32.mrb[0].mxu0
        %v575 = vadd.f32 0.0, %v574
        %576 = vmatprep.mubr.f32.mxu0 %v365
        %577 = vmatmul.mubr.f32.gmra.mrb[0].mxu0 %v364
        %v578 = vpop.f32.mrb[0].mxu0
        %v579 = vadd.f32 0.0, %v578
        %v580 = vpop.f32.mrb[0].mxu0
        %v581 = vadd.f32 0.0, %v580
        %582 = vmatprep.mubr.f32.mxu0 %v367
        %583 = vmatmul.mubr.f32.gmra.mrb[0].mxu0 %v366
        %v584 = vpop.f32.mrb[0].mxu0
        %v585 = vadd.f32 0.0, %v584
        %v586 = vpop.f32.mrb[0].mxu0
        %v587 = vadd.f32 0.0, %v586
        %588 = vmatprep.mubr.f32.mxu0 %v369
        %589 = vmatmul.mubr.f32.gmra.mrb[0].mxu0 %v368
        %v590 = vpop.f32.mrb[0].mxu0
        %v591 = vadd.f32 0.0, %v590
        %v592 = vpop.f32.mrb[0].mxu0
        %v593 = vadd.f32 0.0, %v592
        %594 = vmatprep.mubr.f32.mxu0 %v371
        %595 = vmatmul.mubr.f32.gmra.mrb[0].mxu0 %v370
        %v596 = vpop.f32.mrb[0].mxu0
        %v597 = vadd.f32 0.0, %v596
        %v598 = vpop.f32.mrb[0].mxu0
        %v599 = vadd.f32 0.0, %v598
        %600 = vmatprep.mubr.f32.mxu0 %v373
        %601 = vmatmul.mubr.f32.gmra.mrb[0].mxu0 %v372
        %v602 = vpop.f32.mrb[0].mxu0
        %v603 = vadd.f32 0.0, %v602
        %v604 = vpop.f32.mrb[0].mxu0
        %v605 = vadd.f32 0.0, %v604
        %606 = vmatprep.mubr.f32.mxu0 %v375
        %607 = vmatmul.mubr.f32.gmra.mrb[0].mxu0 %v374
        %v608 = vpop.f32.mrb[0].mxu0
        %v609 = vadd.f32 0.0, %v608
        %v610 = vpop.f32.mrb[0].mxu0
        %v611 = vadd.f32 0.0, %v610
        %612 = vmatprep.mubr.f32.mxu0 %v377
        %613 = vmatmul.mubr.f32.gmra.mrb[0].mxu0 %v376
        %v614 = vpop.f32.mrb[0].mxu0
        %v615 = vadd.f32 0.0, %v614
        %v616 = vpop.f32.mrb[0].mxu0
        %v617 = vadd.f32 0.0, %v616
        %618 = vmatprep.mubr.f32.mxu0 %v379
        %619 = vmatmul.mubr.f32.gmra.mrb[0].mxu0 %v378
        %v620 = vpop.f32.mrb[0].mxu0
        %v621 = vadd.f32 0.0, %v620
        %v622 = vpop.f32.mrb[0].mxu0
        %v623 = vadd.f32 0.0, %v622
        %624 = vmatprep.mubr.f32.mxu0 %v381
        %625 = vmatmul.mubr.f32.gmra.mrb[0].mxu0 %v380
        %v626 = vpop.f32.mrb[0].mxu0
        %v627 = vadd.f32 0.0, %v626
        %v628 = vpop.f32.mrb[0].mxu0
        %v629 = vadd.f32 0.0, %v628
        %630 = vmatprep.mubr.f32.mxu0 %v383
        %631 = vmatmul.mubr.f32.gmra.mrb[0].mxu0 %v382
        %v632 = vpop.f32.mrb[0].mxu0
        %v633 = vadd.f32 0.0, %v632
        %v634 = vpop.f32.mrb[0].mxu0
        %v635 = vadd.f32 0.0, %v634
        %636 = vmatprep.mubr.f32.mxu0 %v385
        %637 = vmatmul.mubr.f32.gmra.mrb[0].mxu0 %v384
        %v638 = vpop.f32.mrb[0].mxu0
        %v639 = vadd.f32 0.0, %v638
        %v640 = vpop.f32.mrb[0].mxu0
        %v641 = vadd.f32 0.0, %v640
        %642 = vmatprep.mubr.f32.mxu0 %v387
        %643 = vmatmul.mubr.f32.gmra.mrb[0].mxu0 %v386
        %v644 = vpop.f32.mrb[0].mxu0
        %v645 = vadd.f32 0.0, %v644
        %v646 = vpop.f32.mrb[0].mxu0
        %v647 = vadd.f32 0.0, %v646
        %648 = vmatprep.mubr.f32.mxu0 %v389
        %649 = vmatmul.mubr.f32.gmra.mrb[0].mxu0 %v388
        %v650 = vpop.f32.mrb[0].mxu0
        %v651 = vadd.f32 0.0, %v650
        %v652 = vpop.f32.mrb[0].mxu0
        %v653 = vadd.f32 0.0, %v652
        %654 = vmatprep.mubr.f32.mxu0 %v391
        %655 = vmatmul.mubr.f32.gmra.mrb[0].mxu0 %v390
        %v656 = vpop.f32.mrb[0].mxu0
        %v657 = vadd.f32 0.0, %v656
        %v658 = vpop.f32.mrb[0].mxu0
        %v659 = vadd.f32 0.0, %v658
        %660 = vmatprep.mubr.f32.mxu0 %v393
        %661 = vmatmul.mubr.f32.gmra.mrb[0].mxu0 %v392
        %v662 = vpop.f32.mrb[0].mxu0
        %v663 = vadd.f32 0.0, %v662
        %v664 = vpop.f32.mrb[0].mxu0
        %v665 = vadd.f32 0.0, %v664
        %666 = vmatprep.mubr.f32.mxu0 %v395
        %667 = vmatmul.mubr.f32.gmra.mrb[0].mxu0 %v394
        %v668 = vpop.f32.mrb[0].mxu0
        %v669 = vadd.f32 0.0, %v668
        %v670 = vpop.f32.mrb[0].mxu0
        %v671 = vadd.f32 0.0, %v670
        %672 = vmatprep.mubr.f32.mxu0 %v397
        %673 = vmatmul.mubr.f32.gmra.mrb[0].mxu0 %v396
        %v674 = vpop.f32.mrb[0].mxu0
        %v675 = vadd.f32 0.0, %v674
        %v676 = vpop.f32.mrb[0].mxu0
        %v677 = vadd.f32 0.0, %v676
        %678 = vmatprep.mubr.f32.mxu0 %v399
        %679 = vmatmul.mubr.f32.gmra.mrb[0].mxu0 %v398
        %v680 = vpop.f32.mrb[0].mxu0
        %v681 = vadd.f32 0.0, %v680
        %v682 = vpop.f32.mrb[0].mxu0
        %v683 = vadd.f32 0.0, %v682
        %684 = vmatprep.mubr.f32.mxu0 %v401
        %685 = vmatmul.mubr.f32.gmra.mrb[0].mxu0 %v400
        %v686 = vpop.f32.mrb[0].mxu0
        %v687 = vadd.f32 0.0, %v686
        %v688 = vpop.f32.mrb[0].mxu0
        %v689 = vadd.f32 0.0, %v688
        %690 = vmatprep.mubr.f32.mxu0 %v403
        %691 = vmatmul.mubr.f32.gmra.mrb[0].mxu0 %v402
        %v692 = vpop.f32.mrb[0].mxu0
        %v693 = vadd.f32 0.0, %v692
        %v694 = vpop.f32.mrb[0].mxu0
        %v695 = vadd.f32 0.0, %v694
        %696 = vmatprep.mubr.f32.mxu0 %v405
        %697 = vmatmul.mubr.f32.gmra.mrb[0].mxu0 %v404
        %v698 = vpop.f32.mrb[0].mxu0
        %v699 = vadd.f32 0.0, %v698
        %v700 = vpop.f32.mrb[0].mxu0
        %v701 = vadd.f32 0.0, %v700
        %702 = vmatprep.mubr.f32.mxu0 %v407
        %703 = vmatmul.mubr.f32.gmra.mrb[0].mxu0 %v406
        %v704 = vpop.f32.mrb[0].mxu0
        %v705 = vadd.f32 0.0, %v704
        %v706 = vpop.f32.mrb[0].mxu0
        %v707 = vadd.f32 0.0, %v706
        %708 = vmatprep.mubr.f32.mxu0 %v409
        %709 = vmatmul.mubr.f32.gmra.mrb[0].mxu0 %v408
        %v710 = vpop.f32.mrb[0].mxu0
        %v711 = vadd.f32 0.0, %v710
        %v712 = vpop.f32.mrb[0].mxu0
        %v713 = vadd.f32 0.0, %v712
        %714 = vmatprep.mubr.f32.mxu0 %v411
        %715 = vmatmul.mubr.f32.gmra.mrb[0].mxu0 %v410
        %v716 = vpop.f32.mrb[0].mxu0
        %v717 = vadd.f32 0.0, %v716
        %v718 = vpop.f32.mrb[0].mxu0
        %v719 = vadd.f32 0.0, %v718
        %720 = vmatprep.mubr.f32.mxu0 %v413
        %721 = vmatmul.mubr.f32.gmra.mrb[0].mxu0 %v412
        %v722 = vpop.f32.mrb[0].mxu0
        %v723 = vadd.f32 0.0, %v722
        %v724 = vpop.f32.mrb[0].mxu0
        %v725 = vadd.f32 0.0, %v724
        %726 = vmatprep.mubr.f32.mxu0 %v415
        %727 = vmatmul.mubr.f32.gmra.mrb[0].mxu0 %v414
        %v728 = vpop.f32.mrb[0].mxu0
        %v729 = vadd.f32 0.0, %v728
        %v730 = vpop.f32.mrb[0].mxu0
        %v731 = vadd.f32 0.0, %v730
        %732 = vmatprep.mubr.f32.mxu0 %v417
        %733 = vmatmul.mubr.f32.gmra.mrb[0].mxu0 %v416
        %v734 = vpop.f32.mrb[0].mxu0
        %v735 = vadd.f32 0.0, %v734
        %v736 = vpop.f32.mrb[0].mxu0
        %v737 = vadd.f32 0.0, %v736
        %738 = vdwg.mxu0
        %v739 = vadd.f32 %v290, %v549
        %v740 = vadd.f32 %v291, %v551
        %v741 = vadd.f32 %v292, %v555
        %v742 = vadd.f32 %v293, %v557
        %v743 = vadd.f32 %v294, %v561
        %v744 = vadd.f32 %v295, %v563
        %v745 = vadd.f32 %v296, %v567
        %v746 = vadd.f32 %v297, %v569
        %v747 = vadd.f32 %v298, %v573
        %v748 = vadd.f32 %v299, %v575
        %v749 = vadd.f32 %v300, %v579
        %v750 = vadd.f32 %v301, %v581
        %v751 = vadd.f32 %v302, %v585
        %v752 = vadd.f32 %v303, %v587
        %v753 = vadd.f32 %v304, %v591
        %v754 = vadd.f32 %v305, %v593
        %v755 = vadd.f32 %v306, %v597
        %v756 = vadd.f32 %v307, %v599
        %v757 = vadd.f32 %v308, %v603
        %v758 = vadd.f32 %v309, %v605
        %v759 = vadd.f32 %v310, %v609
        %v760 = vadd.f32 %v311, %v611
        %v761 = vadd.f32 %v312, %v615
        %v762 = vadd.f32 %v313, %v617
        %v763 = vadd.f32 %v314, %v621
        %v764 = vadd.f32 %v315, %v623
        %v765 = vadd.f32 %v316, %v627
        %v766 = vadd.f32 %v317, %v629
        %v767 = vadd.f32 %v318, %v633
        %v768 = vadd.f32 %v319, %v635
        %v769 = vadd.f32 %v320, %v639
        %v770 = vadd.f32 %v321, %v641
        %v771 = vadd.f32 %v322, %v645
        %v772 = vadd.f32 %v323, %v647
        %v773 = vadd.f32 %v324, %v651
        %v774 = vadd.f32 %v325, %v653
        %v775 = vadd.f32 %v326, %v657
        %v776 = vadd.f32 %v327, %v659
        %v777 = vadd.f32 %v328, %v663
        %v778 = vadd.f32 %v329, %v665
        %v779 = vadd.f32 %v330, %v669
        %v780 = vadd.f32 %v331, %v671
        %v781 = vadd.f32 %v332, %v675
        %v782 = vadd.f32 %v333, %v677
        %v783 = vadd.f32 %v334, %v681
        %v784 = vadd.f32 %v335, %v683
        %v785 = vadd.f32 %v336, %v687
        %v786 = vadd.f32 %v337, %v689
        %v787 = vadd.f32 %v338, %v693
        %v788 = vadd.f32 %v339, %v695
        %v789 = vadd.f32 %v340, %v699
        %v790 = vadd.f32 %v341, %v701
        %v791 = vadd.f32 %v342, %v705
        %v792 = vadd.f32 %v343, %v707
        %v793 = vadd.f32 %v344, %v711
        %v794 = vadd.f32 %v345, %v713
        %v795 = vadd.f32 %v346, %v717
        %v796 = vadd.f32 %v347, %v719
        %v797 = vadd.f32 %v348, %v723
        %v798 = vadd.f32 %v349, %v725
        %v799 = vadd.f32 %v350, %v729
        %v800 = vadd.f32 %v351, %v731
        %v801 = vadd.f32 %v352, %v735
        %v802 = vadd.f32 %v353, %v737
        %803 = vst [vmem:[#allocation2] sm:$0xff] %v739
        %804 = vst [vmem:[#allocation2 + $0x8] sm:$0xff] %v740
        %805 = vst [vmem:[#allocation2 + $0x10] sm:$0xff] %v741
        %806 = vst [vmem:[#allocation2 + $0x18] sm:$0xff] %v742
        %807 = vst [vmem:[#allocation2 + $0x20] sm:$0xff] %v743
        %808 = vst [vmem:[#allocation2 + $0x28] sm:$0xff] %v744
        %809 = vst [vmem:[#allocation2 + $0x30] sm:$0xff] %v745
        %810 = vst [vmem:[#allocation2 + $0x38] sm:$0xff] %v746
        %811 = vst [vmem:[#allocation2 + $0x40] sm:$0xff] %v747
        %812 = vst [vmem:[#allocation2 + $0x48] sm:$0xff] %v748
        %813 = vst [vmem:[#allocation2 + $0x50] sm:$0xff] %v749
        %814 = vst [vmem:[#allocation2 + $0x58] sm:$0xff] %v750
        %815 = vst [vmem:[#allocation2 + $0x60] sm:$0xff] %v751
        %816 = vst [vmem:[#allocation2 + $0x68] sm:$0xff] %v752
        %817 = vst [vmem:[#allocation2 + $0x70] sm:$0xff] %v753
        %818 = vst [vmem:[#allocation2 + $0x78] sm:$0xff] %v754
        %819 = vst [vmem:[#allocation2 + $0x80] sm:$0xff] %v755
        %820 = vst [vmem:[#allocation2 + $0x88] sm:$0xff] %v756
        %821 = vst [vmem:[#allocation2 + $0x90] sm:$0xff] %v757
        %822 = vst [vmem:[#allocation2 + $0x98] sm:$0xff] %v758
        %823 = vst [vmem:[#allocation2 + $0xa0] sm:$0xff] %v759
        %824 = vst [vmem:[#allocation2 + $0xa8] sm:$0xff] %v760
        %825 = vst [vmem:[#allocation2 + $0xb0] sm:$0xff] %v761
        %826 = vst [vmem:[#allocation2 + $0xb8] sm:$0xff] %v762
        %827 = vst [vmem:[#allocation2 + $0xc0] sm:$0xff] %v763
        %828 = vst [vmem:[#allocation2 + $0xc8] sm:$0xff] %v764
        %829 = vst [vmem:[#allocation2 + $0xd0] sm:$0xff] %v765
        %830 = vst [vmem:[#allocation2 + $0xd8] sm:$0xff] %v766
        %831 = vst [vmem:[#allocation2 + $0xe0] sm:$0xff] %v767
        %832 = vst [vmem:[#allocation2 + $0xe8] sm:$0xff] %v768
        %833 = vst [vmem:[#allocation2 + $0xf0] sm:$0xff] %v769
        %834 = vst [vmem:[#allocation2 + $0xf8] sm:$0xff] %v770
        %835 = vst [vmem:[#allocation2 + $0x100] sm:$0xff] %v771
        %836 = vst [vmem:[#allocation2 + $0x108] sm:$0xff] %v772
        %837 = vst [vmem:[#allocation2 + $0x110] sm:$0xff] %v773
        %838 = vst [vmem:[#allocation2 + $0x118] sm:$0xff] %v774
        %839 = vst [vmem:[#allocation2 + $0x120] sm:$0xff] %v775
        %840 = vst [vmem:[#allocation2 + $0x128] sm:$0xff] %v776
        %841 = vst [vmem:[#allocation2 + $0x130] sm:$0xff] %v777
        %842 = vst [vmem:[#allocation2 + $0x138] sm:$0xff] %v778
        %843 = vst [vmem:[#allocation2 + $0x140] sm:$0xff] %v779
        %844 = vst [vmem:[#allocation2 + $0x148] sm:$0xff] %v780
        %845 = vst [vmem:[#allocation2 + $0x150] sm:$0xff] %v781
        %846 = vst [vmem:[#allocation2 + $0x158] sm:$0xff] %v782
        %847 = vst [vmem:[#allocation2 + $0x160] sm:$0xff] %v783
        %848 = vst [vmem:[#allocation2 + $0x168] sm:$0xff] %v784
        %849 = vst [vmem:[#allocation2 + $0x170] sm:$0xff] %v785
        %850 = vst [vmem:[#allocation2 + $0x178] sm:$0xff] %v786
        %851 = vst [vmem:[#allocation2 + $0x180] sm:$0xff] %v787
        %852 = vst [vmem:[#allocation2 + $0x188] sm:$0xff] %v788
        %853 = vst [vmem:[#allocation2 + $0x190] sm:$0xff] %v789
        %854 = vst [vmem:[#allocation2 + $0x198] sm:$0xff] %v790
        %855 = vst [vmem:[#allocation2 + $0x1a0] sm:$0xff] %v791
        %856 = vst [vmem:[#allocation2 + $0x1a8] sm:$0xff] %v792
        %857 = vst [vmem:[#allocation2 + $0x1b0] sm:$0xff] %v793
        %858 = vst [vmem:[#allocation2 + $0x1b8] sm:$0xff] %v794
        %859 = vst [vmem:[#allocation2 + $0x1c0] sm:$0xff] %v795
        %860 = vst [vmem:[#allocation2 + $0x1c8] sm:$0xff] %v796
        %861 = vst [vmem:[#allocation2 + $0x1d0] sm:$0xff] %v797
        %862 = vst [vmem:[#allocation2 + $0x1d8] sm:$0xff] %v798
        %863 = vst [vmem:[#allocation2 + $0x1e0] sm:$0xff] %v799
        %864 = vst [vmem:[#allocation2 + $0x1e8] sm:$0xff] %v800
        %865 = vst [vmem:[#allocation2 + $0x1f0] sm:$0xff] %v801
        %866 = vst [vmem:[#allocation2 + $0x1f8] sm:$0xff] %v802
        // Predicated region
        $region41: #{tpu_custom_call.1} parent=27 // pred_check
          %p867 = pneg %p222
        $region42: #{tpu_custom_call.1} parent=27 // pred_check_branch
          %869 = sbr.rel (%p867) target = $region44
        $region43: #{tpu_custom_call.1} parent=27 // pred_region
          %v870 = vld [vmem:[#allocation2] sm:$0xff]
          %v871 = vld [vmem:[#allocation2 + $0x8] sm:$0xff]
          %v872 = vld [vmem:[#allocation2 + $0x10] sm:$0xff]
          %v873 = vld [vmem:[#allocation2 + $0x18] sm:$0xff]
          %v874 = vld [vmem:[#allocation2 + $0x20] sm:$0xff]
          %v875 = vld [vmem:[#allocation2 + $0x28] sm:$0xff]
          %v876 = vld [vmem:[#allocation2 + $0x30] sm:$0xff]
          %v877 = vld [vmem:[#allocation2 + $0x38] sm:$0xff]
          %v878 = vld [vmem:[#allocation2 + $0x40] sm:$0xff]
          %v879 = vld [vmem:[#allocation2 + $0x48] sm:$0xff]
          %v880 = vld [vmem:[#allocation2 + $0x50] sm:$0xff]
          %v881 = vld [vmem:[#allocation2 + $0x58] sm:$0xff]
          %v882 = vld [vmem:[#allocation2 + $0x60] sm:$0xff]
          %v883 = vld [vmem:[#allocation2 + $0x68] sm:$0xff]
          %v884 = vld [vmem:[#allocation2 + $0x70] sm:$0xff]
          %v885 = vld [vmem:[#allocation2 + $0x78] sm:$0xff]
          %v886 = vld [vmem:[#allocation2 + $0x80] sm:$0xff]
          %v887 = vld [vmem:[#allocation2 + $0x88] sm:$0xff]
          %v888 = vld [vmem:[#allocation2 + $0x90] sm:$0xff]
          %v889 = vld [vmem:[#allocation2 + $0x98] sm:$0xff]
          %v890 = vld [vmem:[#allocation2 + $0xa0] sm:$0xff]
          %v891 = vld [vmem:[#allocation2 + $0xa8] sm:$0xff]
          %v892 = vld [vmem:[#allocation2 + $0xb0] sm:$0xff]
          %v893 = vld [vmem:[#allocation2 + $0xb8] sm:$0xff]
          %v894 = vld [vmem:[#allocation2 + $0xc0] sm:$0xff]
          %v895 = vld [vmem:[#allocation2 + $0xc8] sm:$0xff]
          %v896 = vld [vmem:[#allocation2 + $0xd0] sm:$0xff]
          %v897 = vld [vmem:[#allocation2 + $0xd8] sm:$0xff]
          %v898 = vld [vmem:[#allocation2 + $0xe0] sm:$0xff]
          %v899 = vld [vmem:[#allocation2 + $0xe8] sm:$0xff]
          %v900 = vld [vmem:[#allocation2 + $0xf0] sm:$0xff]
          %v901 = vld [vmem:[#allocation2 + $0xf8] sm:$0xff]
          %v902 = vld [vmem:[#allocation2 + $0x100] sm:$0xff]
          %v903 = vld [vmem:[#allocation2 + $0x108] sm:$0xff]
          %v904 = vld [vmem:[#allocation2 + $0x110] sm:$0xff]
          %v905 = vld [vmem:[#allocation2 + $0x118] sm:$0xff]
          %v906 = vld [vmem:[#allocation2 + $0x120] sm:$0xff]
          %v907 = vld [vmem:[#allocation2 + $0x128] sm:$0xff]
          %v908 = vld [vmem:[#allocation2 + $0x130] sm:$0xff]
          %v909 = vld [vmem:[#allocation2 + $0x138] sm:$0xff]
          %v910 = vld [vmem:[#allocation2 + $0x140] sm:$0xff]
          %v911 = vld [vmem:[#allocation2 + $0x148] sm:$0xff]
          %v912 = vld [vmem:[#allocation2 + $0x150] sm:$0xff]
          %v913 = vld [vmem:[#allocation2 + $0x158] sm:$0xff]
          %v914 = vld [vmem:[#allocation2 + $0x160] sm:$0xff]
          %v915 = vld [vmem:[#allocation2 + $0x168] sm:$0xff]
          %v916 = vld [vmem:[#allocation2 + $0x170] sm:$0xff]
          %v917 = vld [vmem:[#allocation2 + $0x178] sm:$0xff]
          %v918 = vld [vmem:[#allocation2 + $0x180] sm:$0xff]
          %v919 = vld [vmem:[#allocation2 + $0x188] sm:$0xff]
          %v920 = vld [vmem:[#allocation2 + $0x190] sm:$0xff]
          %v921 = vld [vmem:[#allocation2 + $0x198] sm:$0xff]
          %v922 = vld [vmem:[#allocation2 + $0x1a0] sm:$0xff]
          %v923 = vld [vmem:[#allocation2 + $0x1a8] sm:$0xff]
          %v924 = vld [vmem:[#allocation2 + $0x1b0] sm:$0xff]
          %v925 = vld [vmem:[#allocation2 + $0x1b8] sm:$0xff]
          %v926 = vld [vmem:[#allocation2 + $0x1c0] sm:$0xff]
          %v927 = vld [vmem:[#allocation2 + $0x1c8] sm:$0xff]
          %v928 = vld [vmem:[#allocation2 + $0x1d0] sm:$0xff]
          %v929 = vld [vmem:[#allocation2 + $0x1d8] sm:$0xff]
          %v930 = vld [vmem:[#allocation2 + $0x1e0] sm:$0xff]
          %v931 = vld [vmem:[#allocation2 + $0x1e8] sm:$0xff]
          %v932 = vld [vmem:[#allocation2 + $0x1f0] sm:$0xff]
          %v933 = vld [vmem:[#allocation2 + $0x1f8] sm:$0xff]
          %934 = vst [vmem:[%s215] sm:$0xff] %v870
          %935 = vst [vmem:[%s215 + $0x8] sm:$0xff] %v871
          %936 = vst [vmem:[%s215 + $0x10] sm:$0xff] %v872
          %937 = vst [vmem:[%s215 + $0x18] sm:$0xff] %v873
          %938 = vst [vmem:[%s215 + $0x20] sm:$0xff] %v874
          %939 = vst [vmem:[%s215 + $0x28] sm:$0xff] %v875
          %940 = vst [vmem:[%s215 + $0x30] sm:$0xff] %v876
          %941 = vst [vmem:[%s215 + $0x38] sm:$0xff] %v877
          %942 = vst [vmem:[%s215 + $0x40] sm:$0xff] %v878
          %943 = vst [vmem:[%s215 + $0x48] sm:$0xff] %v879
          %944 = vst [vmem:[%s215 + $0x50] sm:$0xff] %v880
          %945 = vst [vmem:[%s215 + $0x58] sm:$0xff] %v881
          %946 = vst [vmem:[%s215 + $0x60] sm:$0xff] %v882
          %947 = vst [vmem:[%s215 + $0x68] sm:$0xff] %v883
          %948 = vst [vmem:[%s215 + $0x70] sm:$0xff] %v884
          %949 = vst [vmem:[%s215 + $0x78] sm:$0xff] %v885
          %950 = vst [vmem:[%s215 + $0x80] sm:$0xff] %v886
          %951 = vst [vmem:[%s215 + $0x88] sm:$0xff] %v887
          %952 = vst [vmem:[%s215 + $0x90] sm:$0xff] %v888
          %953 = vst [vmem:[%s215 + $0x98] sm:$0xff] %v889
          %954 = vst [vmem:[%s215 + $0xa0] sm:$0xff] %v890
          %955 = vst [vmem:[%s215 + $0xa8] sm:$0xff] %v891
          %956 = vst [vmem:[%s215 + $0xb0] sm:$0xff] %v892
          %957 = vst [vmem:[%s215 + $0xb8] sm:$0xff] %v893
          %958 = vst [vmem:[%s215 + $0xc0] sm:$0xff] %v894
          %959 = vst [vmem:[%s215 + $0xc8] sm:$0xff] %v895
          %960 = vst [vmem:[%s215 + $0xd0] sm:$0xff] %v896
          %961 = vst [vmem:[%s215 + $0xd8] sm:$0xff] %v897
          %962 = vst [vmem:[%s215 + $0xe0] sm:$0xff] %v898
          %963 = vst [vmem:[%s215 + $0xe8] sm:$0xff] %v899
          %964 = vst [vmem:[%s215 + $0xf0] sm:$0xff] %v900
          %965 = vst [vmem:[%s215 + $0xf8] sm:$0xff] %v901
          %966 = vst [vmem:[%s215 + $0x100] sm:$0xff] %v902
          %967 = vst [vmem:[%s215 + $0x108] sm:$0xff] %v903
          %968 = vst [vmem:[%s215 + $0x110] sm:$0xff] %v904
          %969 = vst [vmem:[%s215 + $0x118] sm:$0xff] %v905
          %970 = vst [vmem:[%s215 + $0x120] sm:$0xff] %v906
          %971 = vst [vmem:[%s215 + $0x128] sm:$0xff] %v907
          %972 = vst [vmem:[%s215 + $0x130] sm:$0xff] %v908
          %973 = vst [vmem:[%s215 + $0x138] sm:$0xff] %v909
          %974 = vst [vmem:[%s215 + $0x140] sm:$0xff] %v910
          %975 = vst [vmem:[%s215 + $0x148] sm:$0xff] %v911
          %976 = vst [vmem:[%s215 + $0x150] sm:$0xff] %v912
          %977 = vst [vmem:[%s215 + $0x158] sm:$0xff] %v913
          %978 = vst [vmem:[%s215 + $0x160] sm:$0xff] %v914
          %979 = vst [vmem:[%s215 + $0x168] sm:$0xff] %v915
          %980 = vst [vmem:[%s215 + $0x170] sm:$0xff] %v916
          %981 = vst [vmem:[%s215 + $0x178] sm:$0xff] %v917
          %982 = vst [vmem:[%s215 + $0x180] sm:$0xff] %v918
          %983 = vst [vmem:[%s215 + $0x188] sm:$0xff] %v919
          %984 = vst [vmem:[%s215 + $0x190] sm:$0xff] %v920
          %985 = vst [vmem:[%s215 + $0x198] sm:$0xff] %v921
          %986 = vst [vmem:[%s215 + $0x1a0] sm:$0xff] %v922
          %987 = vst [vmem:[%s215 + $0x1a8] sm:$0xff] %v923
          %988 = vst [vmem:[%s215 + $0x1b0] sm:$0xff] %v924
          %989 = vst [vmem:[%s215 + $0x1b8] sm:$0xff] %v925
          %990 = vst [vmem:[%s215 + $0x1c0] sm:$0xff] %v926
          %991 = vst [vmem:[%s215 + $0x1c8] sm:$0xff] %v927
          %992 = vst [vmem:[%s215 + $0x1d0] sm:$0xff] %v928
          %993 = vst [vmem:[%s215 + $0x1d8] sm:$0xff] %v929
          %994 = vst [vmem:[%s215 + $0x1e0] sm:$0xff] %v930
          %995 = vst [vmem:[%s215 + $0x1e8] sm:$0xff] %v931
          %996 = vst [vmem:[%s215 + $0x1f0] sm:$0xff] %v932
          %997 = vst [vmem:[%s215 + $0x1f8] sm:$0xff] %v933
        $region44: #{tpu_custom_call.1} parent=27 // pred_fallthru
          _
        %s998 = sand.u32 %s105, 1
        %s999 = scalar_lea.sflag [#allocation5], %s998
        %s1000 = sand.u32 %s105, 1
        %s1001 = smul.addr %s1000, 512
        %s1002 = scalar_lea.vmem [#allocation8], %s1001
        // Predicated region
        $region45: #{tpu_custom_call.1} parent=27 // pred_check
          %p1003 = pneg %p115
        $region46: #{tpu_custom_call.1} parent=27 // pred_check_branch
          %1005 = sbr.rel (%p1003) target = $region48
        $region47: #{tpu_custom_call.1} parent=27 // pred_region
          %s1006 = smul.u32 32, %s25
          %s1007 = smul.u32 2, %s26
          %s1009 = ssub.s32 8192, 8192
          %1010 = vsyncadd %s999, %s1009
          %s1011 = smul.addr %s1006, 6
          %s1012 = sadd.s32 %s1007, %s1011
          %s1013 = smul.addr %s1012, 128
          %s1014 = scalar_lea.hbm %s2, %s1013
          %s1015 = sshll.u32 %s1002, 4
          %s1016 = int_to_ptr.vmem [resolvable:$true] %s1015
          %1021 = dma.vmem_to_hbm [thread:$0]  %s1016, 8192, %s1014, %s999, 256, 768, 16
        $region48: #{tpu_custom_call.1} parent=27 // pred_fallthru
          _
      $region28: #{tpu_custom_call.1} parent=5 // pred_fallthru
        _
      %p1022 = scmp.le.s32.totalorder 2, %s15
      // Predicated region
      $region49: #{tpu_custom_call.1} parent=5 // pred_check
        %p1023 = pneg %p1022
      $region50: #{tpu_custom_call.1} parent=5 // pred_check_branch
        %1025 = sbr.rel (%p1023) target = $region52
      $region51: #{tpu_custom_call.1} parent=5 // pred_region
        %s1026 = ssub.s32 %s15, 2
        // Predicated region
        $region53: #{tpu_custom_call.1} parent=51 // pred_check
          %p1027 = pneg %p121
        $region54: #{tpu_custom_call.1} parent=51 // pred_check_branch
          %1029 = sbr.rel (%p1027) target = $region56
        $region55: #{tpu_custom_call.1} parent=51 // pred_region
          %s1030 = sand.u32 %s106, 1
          %s1031 = scalar_lea.sflag [#allocation5], %s1030
          %s1032 = sand.u32 %s106, 1
          %s1033 = smul.addr %s1032, 512
          %s1034 = scalar_lea.vmem [#allocation8], %s1033
          %1035 = dma.done %s1031, 8192
        $region56: #{tpu_custom_call.1} parent=51 // pred_fallthru
          _
      $region52: #{tpu_custom_call.1} parent=5 // pred_fallthru
        _
    $region6: #{tpu_custom_call.1} parent=1 // loop_footer
      %s19 = sadd.s32 1, %s15
    $region7: #{tpu_custom_call.1} parent=1 // loop_footer_branch
      %14 = sbr.rel target = $region3
    $region8: #{tpu_custom_call.1} parent=1 // loop_exit
      _
    %1036 = vsyncpa [#allocation4], 1
    %s1037 = scalar_lea.sflag [#allocation4], 1
    %1038 = vsyncpa %s1037, 1
    %1039 = vsyncpa [#allocation7], 1
    %s1040 = scalar_lea.sflag [#allocation7], 1
    %1041 = vsyncpa %s1040, 1
    %1042 = vsyncpa [#allocation5], 1
    %s1043 = scalar_lea.sflag [#allocation5], 1
    %1044 = vsyncpa %s1043, 1

</llo_original>
